<compile_context>
chip_gen: v7x
topology: tpu7x:2x2x1
jax: 0.10.0
libtpu: 0.0.40
codegen_flags: <defaults>
</compile_context>

<pallas_src>
import functools

import jax
import jax.numpy as jnp
from jax.experimental import pallas as pl
from jax.experimental.pallas import tpu as pltpu


def _gcn_fused_kernel(seq_ref, w_ref, adj_ref, bias_ref, alpha_ref, out_ref,
                      *, n_valid, k_tile, mask_k):
    """One (batch, row-tile, k-tile) grid step of PReLU(adj @ (seq @ W) + bias).

    seq_ref:   (TK, F_in)   input dtype  -- k-tile of node features
    w_ref:     (F_in, F_out) bf16        -- pre-transposed weight, VMEM-resident
    adj_ref:   (TR, TK)     input dtype  -- (row-tile, k-tile) of the adjacency
    bias_ref:  (1, F_out)   f32
    alpha_ref: (1, 1)       f32 in SMEM  -- PReLU slope
    out_ref:   (TR, F_out)  f32          -- resident across k; doubles as accumulator
    """
    k = pl.program_id(2)
    last_k = pl.num_programs(2) - 1

    seq = seq_ref[...]
    adj = adj_ref[...]
    if mask_k:
        # Ragged contraction edge: zero adj columns / seq rows past N so undefined
        # out-of-bounds data cannot corrupt the accumulator.
        base = k * k_tile
        col = base + jax.lax.broadcasted_iota(jnp.int32, adj.shape, 1)
        adj = jnp.where(col < n_valid, adj, 0.0)
        row = base + jax.lax.broadcasted_iota(jnp.int32, seq.shape, 0)
        seq = jnp.where(row < n_valid, seq, 0.0)

    # fc: seq_fts for this k-tile (recomputed per row-tile -- cheap, MXU has slack).
    fts = jnp.dot(seq.astype(jnp.bfloat16), w_ref[...],
                  preferred_element_type=jnp.float32).astype(jnp.bfloat16)
    part = jnp.dot(adj.astype(jnp.bfloat16), fts,
                   preferred_element_type=jnp.float32)

    @pl.when(k == 0)
    def _():
        out_ref[...] = part                    # first k-tile: direct assign, no zero-fill

    @pl.when(k > 0)
    def _():
        out_ref[...] += part                   # accumulate into the resident output block

    @pl.when(k == last_k)
    def _():
        o = out_ref[...] + bias_ref[...]
        alpha = alpha_ref[0, 0]
        out_ref[...] = jnp.where(o > 0.0, o, alpha * o)


def gcn_forward(seq, adj, du, w, bias, alpha, *, row_tile=512, k_tile=1024):
    """seq: (B,N,F_in), adj: (B,N,N) dense, du: unused (signature parity with torch),
    w: (F_out,F_in) (torch nn.Linear layout), bias: (F_out,) or None, alpha: PReLU slope.
    Returns (B, N, F_out) float32.

    row_tile must be a multiple of 8 and k_tile a multiple of 128 (only relevant when N
    exceeds them; otherwise the full dimension is used as the block)."""
    del du  # unused by the dense forward pass
    B, N, F_in = seq.shape
    F_out = w.shape[0]
    assert w.shape[1] == F_in
    if bias is None:
        bias = jnp.zeros((F_out,), jnp.float32)

    # Tile selection: full dim when it fits (always a legal block), otherwise the
    # (8,128)-aligned tile sizes.  Masking is only generated for a ragged k edge.
    TR = row_tile if N > row_tile else N
    TK = k_tile if N > k_tile else N
    ni = pl.cdiv(N, TR)
    nk = pl.cdiv(N, TK)
    mask_k = (N % TK) != 0

    # One-time, tiny parameter relayouts (outside the adj-dominated hot path).
    w_t = jnp.asarray(w).T.astype(jnp.bfloat16)            # (F_in, F_out)
    bias2d = jnp.asarray(bias, jnp.float32).reshape(1, F_out)
    alpha_sc = jnp.asarray(alpha, jnp.float32).reshape(1, 1)

    kernel = functools.partial(_gcn_fused_kernel, n_valid=N, k_tile=TK, mask_k=mask_k)

    return pl.pallas_call(
        kernel,
        out_shape=jax.ShapeDtypeStruct((B, N, F_out), jnp.float32),
        grid_spec=pltpu.PrefetchScalarGridSpec(
            num_scalar_prefetch=0,
            grid=(B, ni, nk),
            in_specs=[
                pl.BlockSpec((None, TK, F_in), lambda b, i, k: (b, k, 0)),   # seq k-tile
                pl.BlockSpec((F_in, F_out), lambda b, i, k: (0, 0)),         # W^T (resident)
                pl.BlockSpec((None, TR, TK), lambda b, i, k: (b, i, k)),     # adj tile
                pl.BlockSpec((1, F_out), lambda b, i, k: (0, 0)),            # bias (resident)
                pl.BlockSpec(memory_space=pltpu.MemorySpace.SMEM),           # alpha scalar
            ],
            out_specs=pl.BlockSpec((None, TR, F_out), lambda b, i, k: (b, i, 0)),
        ),
        compiler_params=pltpu.CompilerParams(
            dimension_semantics=("parallel", "parallel", "arbitrary"),
            vmem_limit_bytes=32 * 1024 * 1024,
        ),
    )(seq, w_t, adj, bias2d, alpha_sc)


def reference_forward(seq, adj, w, bias, alpha):
    # Mirrors the kernel's bf16 input quantization (all accumulation in f32).
    seq_b = seq.astype(jnp.bfloat16).astype(jnp.float32)
    adj_b = adj.astype(jnp.bfloat16).astype(jnp.float32)
    w_b = w.astype(jnp.bfloat16).astype(jnp.float32)
    seq_fts = jnp.einsum("bnf,of->bno", seq_b, w_b)
    seq_fts = seq_fts.astype(jnp.bfloat16).astype(jnp.float32)  # in-kernel fts dtype
    out = jnp.einsum("bnm,bmo->bno", adj_b, seq_fts) + bias
    return jnp.where(out > 0, out, alpha * out)


if __name__ == "__main__":
    key = jax.random.PRNGKey(0)

    def make_case(k, B, N, F_in, F_out):
        k_seq, k_adj, k_w = jax.random.split(k, 3)
        seq = jax.random.normal(k_seq, (B, N, F_in), dtype=jnp.float32)
        adj = jax.random.normal(k_adj, (B, N, N), dtype=jnp.float32)
        du = jnp.ones((B, N), dtype=jnp.float32)        # unused by forward
        bound = (6.0 / (F_in + F_out)) ** 0.5           # xavier_uniform_
        w = jax.random.uniform(k_w, (F_out, F_in), minval=-bound, maxval=bound,
                               dtype=jnp.float32)
        bias = jnp.zeros((F_out,), dtype=jnp.float32)   # module inits bias to 0
        return seq, adj, du, w, bias

    alpha = 0.25  # torch PReLU default slope
    k1, k2 = jax.random.split(key)

    # Case 1: tiny shapes, single tile, no ragged edges.
    seq, adj, du, w, bias = make_case(k1, B=2, N=16, F_in=32, F_out=32)
    out = gcn_forward(seq, adj, du, w, bias, alpha)
    jax.block_until_ready(out)
    ref = reference_forward(seq, adj, w, bias, alpha)
    assert out.shape == ref.shape
    assert jnp.allclose(out, ref, atol=1e-2, rtol=1e-2)

    # Case 2: non-aligned N exercising multi-tile k accumulation + in-kernel ragged masks.
    seq, adj, du, w, bias = make_case(k2, B=2, N=200, F_in=32, F_out=48)
    out = gcn_forward(seq, adj, du, w, bias, alpha, row_tile=128, k_tile=128)
    jax.block_until_ready(out)
    ref = reference_forward(seq, adj, w, bias, alpha)
    assert out.shape == ref.shape
    assert jnp.allclose(out, ref, atol=1e-2, rtol=1e-2)

    print("KERNEL_OK")
</pallas_src>

<mosaic_0001>
module attributes {stable_mosaic.version = 11 : i64} {
  func.func @_gcn_fused_kernel(%arg0: i32, %arg1: i32, %arg2: i32, %arg3: memref<1x16x32xf32, #tpu.memory_space<vmem>>, %arg4: memref<32x32xbf16, #tpu.memory_space<vmem>>, %arg5: memref<1x16x16xf32, #tpu.memory_space<vmem>>, %arg6: memref<1x32xf32, #tpu.memory_space<vmem>>, %arg7: memref<1x1xf32, #tpu.memory_space<smem>>, %arg8: memref<1x16x32xf32, #tpu.memory_space<vmem>>) attributes {dimension_semantics = [#tpu.dimension_semantics<parallel>, #tpu.dimension_semantics<parallel>, #tpu.dimension_semantics<arbitrary>], iteration_bounds = array<i64: 2, 1, 1>, scalar_prefetch = 0 : i64, scratch_operands = 0 : i64, tpu.core_type = #tpu.core_type<tc>, window_params = [{transform_indices = @transform_0, window_bounds = array<i64: 1, 16, 32>}, {pipeline_mode = #tpu.pipeline_mode<synchronous>, transform_indices = @transform_1, window_bounds = array<i64: 32, 32>}, {transform_indices = @transform_2, window_bounds = array<i64: 1, 16, 16>}, {pipeline_mode = #tpu.pipeline_mode<synchronous>, transform_indices = @transform_3, window_bounds = array<i64: 1, 32>}, {transform_indices = @transform_4, window_bounds = array<i64: 1, 1>}, {transform_indices = @transform_5, window_bounds = array<i64: 1, 16, 32>}]} {
    %c0 = arith.constant 0 : index
    %c0_0 = arith.constant 0 : index
    %c0_1 = arith.constant 0 : index
    %0 = vector.load %arg3[%c0, %c0_0, %c0_1] : memref<1x16x32xf32, #tpu.memory_space<vmem>>, vector<1x16x32xf32>
    %1 = vector.shape_cast %0 : vector<1x16x32xf32> to vector<16x32xf32>
    %c0_2 = arith.constant 0 : index
    %c0_3 = arith.constant 0 : index
    %c0_4 = arith.constant 0 : index
    %2 = vector.load %arg5[%c0_2, %c0_3, %c0_4] : memref<1x16x16xf32, #tpu.memory_space<vmem>>, vector<1x16x16xf32>
    %3 = vector.shape_cast %2 : vector<1x16x16xf32> to vector<16x16xf32>
    %4 = arith.truncf %1 : vector<16x32xf32> to vector<16x32xbf16>
    %c0_5 = arith.constant 0 : index
    %c0_6 = arith.constant 0 : index
    %5 = vector.load %arg4[%c0_5, %c0_6] : memref<32x32xbf16, #tpu.memory_space<vmem>>, vector<32x32xbf16>
    %cst = arith.constant dense<0.000000e+00> : vector<16x32xf32>
    %6 = tpu.matmul %4, %5, %cst {dimension_numbers = #tpu.dot_dimension_numbers<[1], [0], [0], [1], [0, 0, 1, 1], [], []>} : vector<16x32xbf16>, vector<32x32xbf16>, vector<16x32xf32> -> vector<16x32xf32>
    %7 = arith.truncf %6 : vector<16x32xf32> to vector<16x32xbf16>
    %8 = arith.truncf %3 : vector<16x16xf32> to vector<16x16xbf16>
    %cst_7 = arith.constant dense<0.000000e+00> : vector<16x32xf32>
    %9 = tpu.matmul %8, %7, %cst_7 {dimension_numbers = #tpu.dot_dimension_numbers<[1], [0], [0], [1], [0, 0, 1, 1], [], []>} : vector<16x16xbf16>, vector<16x32xbf16>, vector<16x32xf32> -> vector<16x32xf32>
    %c0_i32 = arith.constant 0 : i32
    %10 = arith.cmpi eq, %arg2, %c0_i32 : i32
    %11 = arith.extui %10 : i1 to i32
    %c0_i32_8 = arith.constant 0 : i32
    %12 = arith.cmpi ne, %11, %c0_i32_8 : i32
    scf.if %12 {
      %c0_13 = arith.constant 0 : index
      %c0_14 = arith.constant 0 : index
      %c0_15 = arith.constant 0 : index
      %19 = vector.load %arg8[%c0_13, %c0_14, %c0_15] : memref<1x16x32xf32, #tpu.memory_space<vmem>>, vector<1x16x32xf32>
      %20 = vector.shape_cast %19 : vector<1x16x32xf32> to vector<16x32xf32>
      %21 = vector.shape_cast %9 : vector<16x32xf32> to vector<1x16x32xf32>
      tpu.vector_store %arg8[%c0_13, %c0_14, %c0_15], %21 {strides = array<i32>} : memref<1x16x32xf32, #tpu.memory_space<vmem>>, vector<1x16x32xf32>,
    } else {
    }
    %c0_i32_9 = arith.constant 0 : i32
    %13 = arith.cmpi sgt, %arg2, %c0_i32_9 : i32
    %14 = arith.extui %13 : i1 to i32
    %c0_i32_10 = arith.constant 0 : i32
    %15 = arith.cmpi ne, %14, %c0_i32_10 : i32
    scf.if %15 {
      %c0_13 = arith.constant 0 : index
      %c0_14 = arith.constant 0 : index
      %c0_15 = arith.constant 0 : index
      %19 = vector.load %arg8[%c0_13, %c0_14, %c0_15] : memref<1x16x32xf32, #tpu.memory_space<vmem>>, vector<1x16x32xf32>
      %20 = vector.shape_cast %19 : vector<1x16x32xf32> to vector<16x32xf32>
      %21 = arith.addf %20, %9 : vector<16x32xf32>
      %c0_16 = arith.constant 0 : index
      %c0_17 = arith.constant 0 : index
      %c0_18 = arith.constant 0 : index
      %22 = vector.load %arg8[%c0_16, %c0_17, %c0_18] : memref<1x16x32xf32, #tpu.memory_space<vmem>>, vector<1x16x32xf32>
      %23 = vector.shape_cast %22 : vector<1x16x32xf32> to vector<16x32xf32>
      %24 = vector.shape_cast %21 : vector<16x32xf32> to vector<1x16x32xf32>
      tpu.vector_store %arg8[%c0_16, %c0_17, %c0_18], %24 {strides = array<i32>} : memref<1x16x32xf32, #tpu.memory_space<vmem>>, vector<1x16x32xf32>,
    } else {
    }
    %c0_i32_11 = arith.constant 0 : i32
    %16 = arith.cmpi eq, %arg2, %c0_i32_11 : i32
    %17 = arith.extui %16 : i1 to i32
    %c0_i32_12 = arith.constant 0 : i32
    %18 = arith.cmpi ne, %17, %c0_i32_12 : i32
    scf.if %18 {
      %c0_13 = arith.constant 0 : index
      %c0_14 = arith.constant 0 : index
      %c0_15 = arith.constant 0 : index
      %19 = vector.load %arg8[%c0_13, %c0_14, %c0_15] : memref<1x16x32xf32, #tpu.memory_space<vmem>>, vector<1x16x32xf32>
      %20 = vector.shape_cast %19 : vector<1x16x32xf32> to vector<16x32xf32>
      %c0_16 = arith.constant 0 : index
      %c0_17 = arith.constant 0 : index
      %21 = vector.load %arg6[%c0_16, %c0_17] : memref<1x32xf32, #tpu.memory_space<vmem>>, vector<1x32xf32>
      %22 = vector.broadcast %21 : vector<1x32xf32> to vector<16x32xf32>
      %23 = arith.addf %20, %22 : vector<16x32xf32>
      %c0_18 = arith.constant 0 : index
      %c0_19 = arith.constant 0 : index
      %24 = memref.load %arg7[%c0_18, %c0_19] : memref<1x1xf32, #tpu.memory_space<smem>>
      %cst_20 = arith.constant 0.000000e+00 : f32
      %25 = vector.broadcast %cst_20 : f32 to vector<16x32xf32>
      %26 = arith.cmpf ogt, %23, %25 : vector<16x32xf32>
      %27 = vector.broadcast %24 : f32 to vector<16x32xf32>
      %28 = arith.mulf %27, %23 : vector<16x32xf32>
      %29 = arith.select %26, %23, %28 : vector<16x32xi1>, vector<16x32xf32>
      %c0_21 = arith.constant 0 : index
      %c0_22 = arith.constant 0 : index
      %c0_23 = arith.constant 0 : index
      %30 = vector.load %arg8[%c0_21, %c0_22, %c0_23] : memref<1x16x32xf32, #tpu.memory_space<vmem>>, vector<1x16x32xf32>
      %31 = vector.shape_cast %30 : vector<1x16x32xf32> to vector<16x32xf32>
      %32 = vector.shape_cast %29 : vector<16x32xf32> to vector<1x16x32xf32>
      tpu.vector_store %arg8[%c0_21, %c0_22, %c0_23], %32 {strides = array<i32>} : memref<1x16x32xf32, #tpu.memory_space<vmem>>, vector<1x16x32xf32>,
    } else {
    }
    return
  }
  func.func @transform_0(%arg0: i32, %arg1: i32, %arg2: i32) -> (i32, i32, i32) {
    %c0_i32 = arith.constant 0 : i32
    %c0_i32_0 = arith.constant 0 : i32
    return %arg0, %arg2, %c0_i32 : i32, i32, i32
  }
  func.func @transform_1(%arg0: i32, %arg1: i32, %arg2: i32) -> (i32, i32) {
    %c0_i32 = arith.constant 0 : i32
    %c0_i32_0 = arith.constant 0 : i32
    %c0_i32_1 = arith.constant 0 : i32
    return %c0_i32, %c0_i32_0 : i32, i32
  }
  func.func @transform_2(%arg0: i32, %arg1: i32, %arg2: i32) -> (i32, i32, i32) {
    %c0_i32 = arith.constant 0 : i32
    return %arg0, %arg1, %arg2 : i32, i32, i32
  }
  func.func @transform_3(%arg0: i32, %arg1: i32, %arg2: i32) -> (i32, i32) {
    %c0_i32 = arith.constant 0 : i32
    %c0_i32_0 = arith.constant 0 : i32
    %c0_i32_1 = arith.constant 0 : i32
    return %c0_i32, %c0_i32_0 : i32, i32
  }
  func.func @transform_4(%arg0: i32, %arg1: i32, %arg2: i32) -> (i32, i32) {
    %c0_i32 = arith.constant 0 : i32
    %c0_i32_0 = arith.constant 0 : i32
    %c0_i32_1 = arith.constant 0 : i32
    return %c0_i32, %c0_i32_0 : i32, i32
  }
  func.func @transform_5(%arg0: i32, %arg1: i32, %arg2: i32) -> (i32, i32, i32) {
    %c0_i32 = arith.constant 0 : i32
    %c0_i32_0 = arith.constant 0 : i32
    return %arg0, %arg1, %c0_i32 : i32, i32, i32
  }
}

</mosaic_0001>

<llo_original>
// kernel: tpu_custom_call.1
$region0: #{tpu_custom_call.1}
  #allocation0 [shape = 'u32[]', space=smem, size = 0x4, offset = 0x4, fixed_abs, tag = 'smem constant byte address 0x4 - core index']
  #allocation1 [shape = 'u32[144,128]{1,0:T(1,128)}', space=vmem, size = 0x12000, scoped, tag = 'internal scratch']
  #allocation2 [shape = 'f32[1,1]{1,0:T(1,128)S(6)}', space=smem, size = 0x200, scoped, tag = 'scoped memory for tpu_custom_call.1']
  %s0 = inlined_call_operand.hbm [shape: f32[2,16,32], index: 0, kind: input, shape index: {}]
  %s1 = inlined_call_operand.hbm [shape: bf16[32,32], index: 1, kind: input, shape index: {}]
  %s2 = inlined_call_operand.hbm [shape: f32[2,16,16], index: 2, kind: input, shape index: {}]
  %s3 = inlined_call_operand.vmem [shape: f32[1,32], index: 3, kind: input, shape index: {}]
  %s4 = inlined_call_operand.<no memory space> [shape: f32[1,1], index: 4, kind: input, shape index: {}]
  %s5 = inlined_call_operand.hbm [shape: f32[2,16,32], index: 5, kind: output, shape index: {}]
  %s6 = sld [smem:[#allocation0]]
  $region77: #{tpu_custom_call.1} parent=0
    _
  %s8 = ssub.s32 1, %s6
  %s9 = scalar_select 0, %s8, %s6
  %10 = sst [smem:[#allocation2]] %s4
  $region1: #{tpu_custom_call.1} parent=0
    #allocation3 [shape = 'u8[16384]{0}', space=vmem, size = 0x4000, scoped, tag = 'input window, operand 0']
    #allocation4 [shape = 's32[2]{0}', space=sflag, size = 0x8, scoped, tag = 'scoped memory for tpu_custom_call.1']
    #allocation5 [shape = 's32[2]{0}', space=sflag, size = 0x8, scoped, tag = 'scoped memory for tpu_custom_call.1']
    #allocation6 [shape = 'u8[8192]{0}', space=vmem, size = 0x2000, scoped, tag = 'input window, operand 1, single buffered']
    #allocation7 [shape = 's32[1]{0}', space=sflag, size = 0x4, scoped, tag = 'scoped memory for tpu_custom_call.1']
    #allocation8 [shape = 'u8[16384]{0}', space=vmem, size = 0x4000, scoped, tag = 'input window, operand 2']
    #allocation9 [shape = 'u8[16384]{0}', space=vmem, size = 0x4000, scoped, tag = 'output window, operand 0']
    %11 = vsyncpa [#allocation4], 0
    %s12 = scalar_lea.sflag [#allocation4], 1
    %13 = vsyncpa %s12, 0
    %14 = vsyncpa [#allocation7], 0
    %15 = vsyncpa [#allocation5], 0
    %s16 = scalar_lea.sflag [#allocation5], 1
    %17 = vsyncpa %s16, 0
    loop: start=0, step=1, limit=4
    $region2: #{tpu_custom_call.1} parent=1 // loop_pre_header
      _
    $region3: #{tpu_custom_call.1} parent=1 // loop_header
      %s19 = sphi 0, %s23
      %p20 = scmp.ge.s32.totalorder %s19, 4
      %s26 = sphi 0, %s45
      %s27 = sphi 0, %s41
      %s28 = sphi 0, %s37
      %s29 = sphi 0, %s26
      %s30 = sphi 0, %s27
      %s31 = sphi 0, %s28
      %s32 = sphi 0, %s29
      %s33 = sphi 0, %s30
      %s34 = sphi 0, %s31
      %s50 = sphi 0, %s52
      %s53 = sphi 0, %s50
      %s54 = sphi 0, %s53
      %s70 = sphi 0, %s54
      %s74 = sphi 0, %s74
      %s76 = sphi 0, %s74
      %s77 = sphi 0, %s76
      %s91 = sphi 0, %s77
      %s101 = sphi 0, %s103
      %s104 = sphi 0, %s101
      %s105 = sphi 0, %s104
      %s121 = sphi 0, %s105
      %s125 = sphi 0, %s125
      %s127 = sphi 0, %s125
      %s128 = sphi 0, %s127
      %s142 = sphi 0, %s128
      %s146 = sphi 0, %s146
      %s148 = sphi 0, %s146
      %s149 = sphi 0, %s148
      %s163 = sphi 0, %s149
      %s171 = sphi 0, %s173
      %s174 = sphi 0, %s171
      %s175 = sphi 0, %s174
      %s191 = sphi 0, %s175
    $region4: #{tpu_custom_call.1} parent=1 // loop_header_branch
      %22 = sbr.rel (%p20) target = $region8
    $region5: #{tpu_custom_call.1} parent=1 // loop_body
      %s24 = ssub.s32 %s19, 1
      %s25 = ssub.s32 %s19, 2
      %s35 = sadd.s32 1, %s28
      %p36 = scmp.ge.s32.totalorder %s35, 1
      %s37 = scalar_select %p36, 0, %s35
      %s38 = sadd.s32 1, %s27
      %s39 = scalar_select %p36, %s38, %s27
      %p40 = scmp.ge.s32.totalorder %s39, 1
      %s41 = scalar_select %p40, 0, %s39
      %s42 = sadd.s32 1, %s26
      %s43 = scalar_select %p40, %s42, %s26
      %p44 = scmp.ge.s32.totalorder %s43, 2
      %s45 = scalar_select %p44, 0, %s43
      %s46 = ssub.s32 %s26, %s45
      %s47 = ssub.s32 %s28, %s37
      %s48 = sor.u32 %s46, %s47
      %p49 = scmp.eq.s32.totalorder %s48, 0
      %s51 = sadd.s32 %s50, 1
      %s52 = scalar_select %p49, %s50, %s51
      %p55 = pneg %p49
      %p56 = scmp.eq.s32.totalorder %s19, 1
      %p57 = por %p55, %p56
      %p58 = scmp.ne.s32.totalorder %s50, %s53
      %p59 = scmp.eq.s32.totalorder %s19, 0
      %p60 = por %p58, %p59
      %p61 = scmp.ne.s32.totalorder %s50, %s53
      %p62 = scmp.eq.s32.totalorder %s24, 1
      %p63 = por %p61, %p62
      %p64 = scmp.ne.s32.totalorder %s53, %s54
      %p65 = scmp.eq.s32.totalorder %s24, 0
      %p66 = por %p64, %p65
      %p67 = scmp.ne.s32.totalorder %s53, %s54
      %p68 = scmp.eq.s32.totalorder %s25, 1
      %p69 = por %p67, %p68
      %p71 = scmp.ne.s32.totalorder %s54, %s70
      %p72 = scmp.eq.s32.totalorder %s25, 0
      %p73 = por %p71, %p72
      %s75 = sadd.s32 %s74, 1
      %p78 = scmp.eq.s32.totalorder %s19, 1
      %p79 = scmp.ne.s32.totalorder %s74, %s76
      %p80 = scmp.eq.s32.totalorder %s19, 0
      %p81 = por %p79, %p80
      %p82 = scmp.ne.s32.totalorder %s74, %s76
      %p83 = scmp.eq.s32.totalorder %s24, 1
      %p84 = por %p82, %p83
      %p85 = scmp.ne.s32.totalorder %s76, %s77
      %p86 = scmp.eq.s32.totalorder %s24, 0
      %p87 = por %p85, %p86
      %p88 = scmp.ne.s32.totalorder %s76, %s77
      %p89 = scmp.eq.s32.totalorder %s25, 1
      %p90 = por %p88, %p89
      %p92 = scmp.ne.s32.totalorder %s77, %s91
      %p93 = scmp.eq.s32.totalorder %s25, 0
      %p94 = por %p92, %p93
      %s95 = ssub.s32 %s26, %s45
      %s96 = ssub.s32 %s27, %s41
      %s97 = sor.u32 %s95, %s96
      %s98 = ssub.s32 %s28, %s37
      %s99 = sor.u32 %s97, %s98
      %p100 = scmp.eq.s32.totalorder %s99, 0
      %s102 = sadd.s32 %s101, 1
      %s103 = scalar_select %p100, %s101, %s102
      %p106 = pneg %p100
      %p107 = scmp.eq.s32.totalorder %s19, 1
      %p108 = por %p106, %p107
      %p109 = scmp.ne.s32.totalorder %s101, %s104
      %p110 = scmp.eq.s32.totalorder %s19, 0
      %p111 = por %p109, %p110
      %p112 = scmp.ne.s32.totalorder %s101, %s104
      %p113 = scmp.eq.s32.totalorder %s24, 1
      %p114 = por %p112, %p113
      %p115 = scmp.ne.s32.totalorder %s104, %s105
      %p116 = scmp.eq.s32.totalorder %s24, 0
      %p117 = por %p115, %p116
      %p118 = scmp.ne.s32.totalorder %s104, %s105
      %p119 = scmp.eq.s32.totalorder %s25, 1
      %p120 = por %p118, %p119
      %p122 = scmp.ne.s32.totalorder %s105, %s121
      %p123 = scmp.eq.s32.totalorder %s25, 0
      %p124 = por %p122, %p123
      %s126 = sadd.s32 %s125, 1
      %p129 = scmp.eq.s32.totalorder %s19, 1
      %p130 = scmp.ne.s32.totalorder %s125, %s127
      %p131 = scmp.eq.s32.totalorder %s19, 0
      %p132 = por %p130, %p131
      %p133 = scmp.ne.s32.totalorder %s125, %s127
      %p134 = scmp.eq.s32.totalorder %s24, 1
      %p135 = por %p133, %p134
      %p136 = scmp.ne.s32.totalorder %s127, %s128
      %p137 = scmp.eq.s32.totalorder %s24, 0
      %p138 = por %p136, %p137
      %p139 = scmp.ne.s32.totalorder %s127, %s128
      %p140 = scmp.eq.s32.totalorder %s25, 1
      %p141 = por %p139, %p140
      %p143 = scmp.ne.s32.totalorder %s128, %s142
      %p144 = scmp.eq.s32.totalorder %s25, 0
      %p145 = por %p143, %p144
      %s147 = sadd.s32 %s146, 1
      %p150 = scmp.eq.s32.totalorder %s19, 1
      %p151 = scmp.ne.s32.totalorder %s146, %s148
      %p152 = scmp.eq.s32.totalorder %s19, 0
      %p153 = por %p151, %p152
      %p154 = scmp.ne.s32.totalorder %s146, %s148
      %p155 = scmp.eq.s32.totalorder %s24, 1
      %p156 = por %p154, %p155
      %p157 = scmp.ne.s32.totalorder %s148, %s149
      %p158 = scmp.eq.s32.totalorder %s24, 0
      %p159 = por %p157, %p158
      %p160 = scmp.ne.s32.totalorder %s148, %s149
      %p161 = scmp.eq.s32.totalorder %s25, 1
      %p162 = por %p160, %p161
      %p164 = scmp.ne.s32.totalorder %s149, %s163
      %p165 = scmp.eq.s32.totalorder %s25, 0
      %p166 = por %p164, %p165
      %s167 = ssub.s32 %s26, %s45
      %s168 = ssub.s32 %s27, %s41
      %s169 = sor.u32 %s167, %s168
      %p170 = scmp.eq.s32.totalorder %s169, 0
      %s172 = sadd.s32 %s171, 1
      %s173 = scalar_select %p170, %s171, %s172
      %p176 = pneg %p170
      %p177 = scmp.eq.s32.totalorder %s19, 1
      %p178 = por %p176, %p177
      %p179 = scmp.ne.s32.totalorder %s171, %s174
      %p180 = scmp.eq.s32.totalorder %s19, 0
      %p181 = por %p179, %p180
      %p182 = scmp.ne.s32.totalorder %s171, %s174
      %p183 = scmp.eq.s32.totalorder %s24, 1
      %p184 = por %p182, %p183
      %p185 = scmp.ne.s32.totalorder %s174, %s175
      %p186 = scmp.eq.s32.totalorder %s24, 0
      %p187 = por %p185, %p186
      %p188 = scmp.ne.s32.totalorder %s174, %s175
      %p189 = scmp.eq.s32.totalorder %s25, 1
      %p190 = por %p188, %p189
      %p192 = scmp.ne.s32.totalorder %s175, %s191
      %p193 = scmp.eq.s32.totalorder %s25, 0
      %p194 = por %p192, %p193
      %p195 = scmp.le.s32.totalorder 1, %s19
      %p196 = scmp.lt.s32.totalorder %s19, 3
      %p197 = pnand %p195, %p196
      %p198 = pneg %p197
      // Predicated region
      $region9: #{tpu_custom_call.1} parent=5 // pred_check
        _
      $region10: #{tpu_custom_call.1} parent=5 // pred_check_branch
        %200 = sbr.rel (%p197) target = $region12
      $region11: #{tpu_custom_call.1} parent=5 // pred_region
        %s201 = ssub.s32 %s19, 1
        // Predicated region
        $region13: #{tpu_custom_call.1} parent=11 // pred_check
          %p202 = pneg %p87
        $region14: #{tpu_custom_call.1} parent=11 // pred_check_branch
          %204 = sbr.rel (%p202) target = $region16
        $region15: #{tpu_custom_call.1} parent=11 // pred_region
          %s206 = ssub.s32 256, 256
          %207 = vsyncadd [#allocation7], %s206
          %s208 = sshll.u32 [#allocation6], 4
          %s209 = int_to_ptr.vmem [resolvable:$true] %s208
          %214 = dma.hbm_to_vmem [thread:$0]  %s1, 256, %s209, [#allocation7], 64, 64, 4
        $region16: #{tpu_custom_call.1} parent=11 // pred_fallthru
          _
        // Predicated region
        $region17: #{tpu_custom_call.1} parent=11 // pred_check
          %p215 = pneg %p138
        $region18: #{tpu_custom_call.1} parent=11 // pred_check_branch
          %217 = sbr.rel (%p215) target = $region20
        $region19: #{tpu_custom_call.1} parent=11 // pred_region
          _
        $region20: #{tpu_custom_call.1} parent=11 // pred_fallthru
          _
        // Predicated region
        $region21: #{tpu_custom_call.1} parent=11 // pred_check
          %p218 = pneg %p159
        $region22: #{tpu_custom_call.1} parent=11 // pred_check_branch
          %220 = sbr.rel (%p218) target = $region24
        $region23: #{tpu_custom_call.1} parent=11 // pred_region
          _
        $region24: #{tpu_custom_call.1} parent=11 // pred_fallthru
          _
      $region12: #{tpu_custom_call.1} parent=5 // pred_fallthru
        _
      %p221 = scmp.lt.s32.totalorder %s19, 2
      // Predicated region
      $region25: #{tpu_custom_call.1} parent=5 // pred_check
        %p222 = pneg %p221
      $region26: #{tpu_custom_call.1} parent=5 // pred_check_branch
        %224 = sbr.rel (%p222) target = $region28
      $region27: #{tpu_custom_call.1} parent=5 // pred_region
        // Predicated region
        $region29: #{tpu_custom_call.1} parent=27 // pred_check
          %p225 = pneg %p60
        $region30: #{tpu_custom_call.1} parent=27 // pred_check_branch
          %227 = sbr.rel (%p225) target = $region32
        $region31: #{tpu_custom_call.1} parent=27 // pred_region
          %s228 = sand.u32 %s19, 1
          %s229 = scalar_lea.sflag [#allocation4], %s228
          %s230 = sand.u32 %s50, 1
          %s231 = smul.addr %s230, 16
          %s232 = scalar_lea.vmem [#allocation3], %s231
          %s233 = smul.u32 2, %s28
          %s235 = ssub.s32 256, 256
          %236 = vsyncadd %s229, %s235
          %s237 = smul.addr %s26, 2
          %s238 = sadd.s32 %s233, %s237
          %s239 = smul.addr %s238, 128
          %s240 = scalar_lea.hbm %s0, %s239
          %s241 = sshll.u32 %s232, 4
          %s242 = int_to_ptr.vmem [resolvable:$true] %s241
          %247 = dma.hbm_to_vmem [thread:$0]  %s240, 256, %s242, %s229, 128, 128, 8
        $region32: #{tpu_custom_call.1} parent=27 // pred_fallthru
          _
        // Predicated region
        $region33: #{tpu_custom_call.1} parent=27 // pred_check
          %p248 = pneg %p111
        $region34: #{tpu_custom_call.1} parent=27 // pred_check_branch
          %250 = sbr.rel (%p248) target = $region36
        $region35: #{tpu_custom_call.1} parent=27 // pred_region
          %s251 = sand.u32 %s19, 1
          %s252 = scalar_lea.sflag [#allocation4], %s251
          %s253 = sand.u32 %s101, 1
          %s254 = smul.addr %s253, 16
          %s255 = scalar_lea.vmem [#allocation8], %s254
          %s256 = smul.u32 2, %s27
          %s258 = ssub.s32 256, 256
          %259 = vsyncadd %s252, %s258
          %s260 = sadd.s32 %s28, %s256
          %s261 = smul.addr %s26, 2
          %s262 = sadd.s32 %s260, %s261
          %s263 = smul.addr %s262, 128
          %s264 = scalar_lea.hbm %s2, %s263
          %s265 = sshll.u32 %s255, 4
          %s266 = int_to_ptr.vmem [resolvable:$true] %s265
          %271 = dma.hbm_to_vmem [thread:$0]  %s264, 256, %s266, %s252, 128, 128, 8
        $region36: #{tpu_custom_call.1} parent=27 // pred_fallthru
          _
      $region28: #{tpu_custom_call.1} parent=5 // pred_fallthru
        _
      %p272 = scmp.le.s32.totalorder 1, %s19
      %p273 = scmp.lt.s32.totalorder %s19, 3
      %p274 = pnand %p272, %p273
      %p275 = pneg %p274
      // Predicated region
      $region37: #{tpu_custom_call.1} parent=5 // pred_check
        _
      $region38: #{tpu_custom_call.1} parent=5 // pred_check_branch
        %277 = sbr.rel (%p274) target = $region40
      $region39: #{tpu_custom_call.1} parent=5 // pred_region
        %s278 = ssub.s32 %s19, 1
        %s279 = sand.u32 %s24, 1
        %s280 = scalar_lea.sflag [#allocation4], %s279
        %s281 = sand.u32 %s53, 1
        %s282 = smul.addr %s281, 16
        %s283 = scalar_lea.vmem [#allocation3], %s282
        // Predicated region
        $region41: #{tpu_custom_call.1} parent=39 // pred_check
          %p284 = pneg %p66
        $region42: #{tpu_custom_call.1} parent=39 // pred_check_branch
          %286 = sbr.rel (%p284) target = $region44
        $region43: #{tpu_custom_call.1} parent=39 // pred_region
          %287 = dma.done %s280, 256
        $region44: #{tpu_custom_call.1} parent=39 // pred_fallthru
          _
        // Predicated region
        $region45: #{tpu_custom_call.1} parent=39 // pred_check
          %p288 = pneg %p87
        $region46: #{tpu_custom_call.1} parent=39 // pred_check_branch
          %290 = sbr.rel (%p288) target = $region48
        $region47: #{tpu_custom_call.1} parent=39 // pred_region
          %291 = dma.done [#allocation7], 256
        $region48: #{tpu_custom_call.1} parent=39 // pred_fallthru
          _
        %s292 = sand.u32 %s24, 1
        %s293 = scalar_lea.sflag [#allocation4], %s292
        %s294 = sand.u32 %s104, 1
        %s295 = smul.addr %s294, 16
        %s296 = scalar_lea.vmem [#allocation8], %s295
        // Predicated region
        $region49: #{tpu_custom_call.1} parent=39 // pred_check
          %p297 = pneg %p117
        $region50: #{tpu_custom_call.1} parent=39 // pred_check_branch
          %299 = sbr.rel (%p297) target = $region52
        $region51: #{tpu_custom_call.1} parent=39 // pred_region
          %300 = dma.done %s293, 256
        $region52: #{tpu_custom_call.1} parent=39 // pred_fallthru
          _
        %s301 = sand.u32 %s24, 1
        %s302 = scalar_lea.sflag [#allocation4], %s301
        %s303 = sand.u32 %s53, 1
        %s304 = smul.addr %s303, 16
        %s305 = scalar_lea.vmem [#allocation3], %s304
        %p306 = pneg %p66
        %p307 = pneg %p63
        %p308 = pneg %p87
        %p309 = pneg %p84
        %s310 = sand.u32 %s24, 1
        %s311 = scalar_lea.sflag [#allocation4], %s310
        %s312 = sand.u32 %s104, 1
        %s313 = smul.addr %s312, 16
        %s314 = scalar_lea.vmem [#allocation8], %s313
        %p315 = pneg %p117
        %p316 = pneg %p114
        %p317 = pneg %p138
        %p318 = pneg %p135
        %p319 = pneg %p159
        %p320 = pneg %p156
        %p321 = pneg %p187
        %p322 = pneg %p184
        %s323 = sand.u32 %s174, 1
        %s324 = scalar_lea.sflag [#allocation5], %s323
        %s325 = sand.u32 %s174, 1
        %s326 = smul.addr %s325, 16
        %s327 = scalar_lea.vmem [#allocation9], %s326
        %s328 = smul.u32 2, %s31
        %s329 = smul.u32 2, %s30
        %s330 = smul.u32 2, %s30
        %v332 = vld [vmem:[%s283] sm:$0xff]
        %v333 = vld [vmem:[%s283 + $0x8] sm:$0xff]
        %v334 = vld [vmem:[%s296] sm:$0xff]
        %v335 = vld [vmem:[%s296 + $0x8] sm:$0xff]
        %v336 = vpack.c.bf16 %v333, %v332
        %v337 = vld [vmem:[#allocation6] sm:$0xf]
        %v338 = vld [vmem:[#allocation6 + $0x4] sm:$0xf]
        %v339 = vld [vmem:[#allocation6 + $0x8] sm:$0xf]
        %v340 = vld [vmem:[#allocation6 + $0xc] sm:$0xf]
        %v345 = vunpack.c.l.b16 %v337
        %v346 = vunpack.c.l.b16 %v338
        %v347 = vunpack.c.l.b16 %v339
        %v348 = vunpack.c.l.b16 %v340
        %v349 = vpack.c.b16 %v346, %v345
        %v350 = vpack.c.b16 %v348, %v347
        %vm353 = vcmask 261120
        %v355 = vsel %vm353, %v336, 0
        %357 = vmatprep.subr.bf16.mxu0 0
        %358 = vmatpush1.bf16.msra.mxu0 %v349
        %359 = vmatprep.subr.bf16.mxu0 0
        %360 = vmatpush1.bf16.msra.mxu0 %v350
        %361 = vmatprep.subr.bf16.mxu0 0
        %362 = vmatpush1.bf16.msra.mxu0 0
        %363 = vmatprep.subr.bf16.mxu0 0
        %364 = vmatpush1.bf16.msra.mxu0 0
        %365 = vmatprep.subr.bf16.mxu0 0
        %366 = vmatpush1.bf16.msra.mxu0 0
        %367 = vmatprep.subr.bf16.mxu0 0
        %368 = vmatpush1.bf16.msra.mxu0 0
        %369 = vmatprep.subr.bf16.mxu0 0
        %370 = vmatpush1.bf16.msra.mxu0 0
        %371 = vmatprep.subr.bf16.mxu0 0
        %372 = vmatpush1.bf16.msra.mxu0 0
        %373 = vmatprep.subr.bf16.mxu0 0
        %374 = vmatpush1.bf16.msra.mxu0 0
        %375 = vmatprep.subr.bf16.mxu0 0
        %376 = vmatpush1.bf16.msra.mxu0 0
        %377 = vmatprep.subr.bf16.mxu0 0
        %378 = vmatpush1.bf16.msra.mxu0 0
        %379 = vmatprep.subr.bf16.mxu0 0
        %380 = vmatpush1.bf16.msra.mxu0 0
        %381 = vmatprep.subr.bf16.mxu0 0
        %382 = vmatpush1.bf16.msra.mxu0 0
        %383 = vmatprep.subr.bf16.mxu0 0
        %384 = vmatpush1.bf16.msra.mxu0 0
        %385 = vmatprep.subr.bf16.mxu0 0
        %386 = vmatpush1.bf16.msra.mxu0 0
        %387 = vmatprep.subr.bf16.mxu0 0
        %388 = vmatpush1.bf16.msra.mxu0 0
        %389 = vmatprep.mubr.bf16.mxu0 0
        %390 = vmatmul.mubr.bf16.gmra.mrb[0].mxu0 %v355
        %v391 = vpop.f32.mrb[0].mxu0
        %v392 = vadd.f32 0.0, %v391
        %v393 = vpop.f32.mrb[0].mxu0
        %v394 = vpop.f32.mrb[0].mxu0
        %v395 = vadd.f32 0.0, %v394
        %v396 = vpop.f32.mrb[0].mxu0
        %397 = vdwg.mxu0
        %v398 = vpack.c.bf16 %v395, %v392
        %v399 = vpack.c.bf16 %v335, %v334
        %vm400 = vcmask 130048
        %v402 = vsel %vm400, %v399, 0
        %404 = vmatprep.subr.bf16.mxu0 0
        %405 = vmatpush1.bf16.msra.mxu0 %v398
        %406 = vmatprep.subr.bf16.mxu0 0
        %407 = vmatpush1.bf16.msra.mxu0 0
        %408 = vmatprep.subr.bf16.mxu0 0
        %409 = vmatpush1.bf16.msra.mxu0 0
        %410 = vmatprep.subr.bf16.mxu0 0
        %411 = vmatpush1.bf16.msra.mxu0 0
        %412 = vmatprep.subr.bf16.mxu0 0
        %413 = vmatpush1.bf16.msra.mxu0 0
        %414 = vmatprep.subr.bf16.mxu0 0
        %415 = vmatpush1.bf16.msra.mxu0 0
        %416 = vmatprep.subr.bf16.mxu0 0
        %417 = vmatpush1.bf16.msra.mxu0 0
        %418 = vmatprep.subr.bf16.mxu0 0
        %419 = vmatpush1.bf16.msra.mxu0 0
        %420 = vmatprep.subr.bf16.mxu0 0
        %421 = vmatpush1.bf16.msra.mxu0 0
        %422 = vmatprep.subr.bf16.mxu0 0
        %423 = vmatpush1.bf16.msra.mxu0 0
        %424 = vmatprep.subr.bf16.mxu0 0
        %425 = vmatpush1.bf16.msra.mxu0 0
        %426 = vmatprep.subr.bf16.mxu0 0
        %427 = vmatpush1.bf16.msra.mxu0 0
        %428 = vmatprep.subr.bf16.mxu0 0
        %429 = vmatpush1.bf16.msra.mxu0 0
        %430 = vmatprep.subr.bf16.mxu0 0
        %431 = vmatpush1.bf16.msra.mxu0 0
        %432 = vmatprep.subr.bf16.mxu0 0
        %433 = vmatpush1.bf16.msra.mxu0 0
        %434 = vmatprep.subr.bf16.mxu0 0
        %435 = vmatpush1.bf16.msra.mxu0 0
        %436 = vmatprep.mubr.bf16.mxu0 0
        %437 = vmatmul.mubr.bf16.gmra.mrb[0].mxu0 %v402
        %v438 = vpop.f32.mrb[0].mxu0
        %v439 = vadd.f32 0.0, %v438
        %v440 = vpop.f32.mrb[0].mxu0
        %v441 = vpop.f32.mrb[0].mxu0
        %v442 = vadd.f32 0.0, %v441
        %v443 = vpop.f32.mrb[0].mxu0
        %444 = vdwg.mxu0
        %p445 = scmp.eq.s32.totalorder %s31, 0
        // Predicated region
        $region53: #{tpu_custom_call.1} parent=39 // pred_check
          %p446 = pneg %p445
        $region54: #{tpu_custom_call.1} parent=39 // pred_check_branch
          %448 = sbr.rel (%p446) target = $region56
        $region55: #{tpu_custom_call.1} parent=39 // pred_region
          %449 = vst.msk [vmem:[%s327] sm:$0xff] %vm353, %v439
          %450 = vst.msk [vmem:[%s327 + $0x8] sm:$0xff] %vm353, %v442
        $region56: #{tpu_custom_call.1} parent=39 // pred_fallthru
          _
        %p451 = scmp.gt.s32.totalorder %s31, 0
        // Predicated region
        $region57: #{tpu_custom_call.1} parent=39 // pred_check
          %p452 = pneg %p451
        $region58: #{tpu_custom_call.1} parent=39 // pred_check_branch
          %454 = sbr.rel (%p452) target = $region60
        $region59: #{tpu_custom_call.1} parent=39 // pred_region
          %v455 = vld [vmem:[%s327] sm:$0xff]
          %v456 = vld [vmem:[%s327 + $0x8] sm:$0xff]
          %v457 = vadd.f32 %v455, %v439
          %v458 = vadd.f32 %v456, %v442
          %459 = vst.msk [vmem:[%s327] sm:$0xff] %vm353, %v457
          %460 = vst.msk [vmem:[%s327 + $0x8] sm:$0xff] %vm353, %v458
        $region60: #{tpu_custom_call.1} parent=39 // pred_fallthru
          _
        // Predicated region
        $region61: #{tpu_custom_call.1} parent=39 // pred_check
          %p461 = pneg %p445
        $region62: #{tpu_custom_call.1} parent=39 // pred_check_branch
          %463 = sbr.rel (%p461) target = $region64
        $region63: #{tpu_custom_call.1} parent=39 // pred_region
          %v464 = vld [vmem:[%s327] sm:$0xff]
          %v465 = vld [vmem:[%s327 + $0x8] sm:$0xff]
          %v466 = vld [vmem:[%s3] sm:$0x1]
          %v468 = vlaneseq
          %v469 = vshrl.u32 %v468, 7
          %v470 = vsub.s32 0, %v469
          %v471 = vrot.slane %v466, %v470
          %v473 = vadd.f32 %v464, %v471
          %v474 = vadd.f32 %v465, %v471
          %s475 = sld [smem:[#allocation2]]
          %vm476 = vcmp.gt.f32.partialorder %v473, 0.0
          %vm477 = vcmp.gt.f32.partialorder %v474, 0.0
          %v478 = vstv %s475
          %v479 = vmul.f32 %v478, %v473
          %v480 = vmul.f32 %v478, %v474
          %v481 = vsel %vm476, %v473, %v479
          %v482 = vsel %vm477, %v474, %v480
          %483 = vst.msk [vmem:[%s327] sm:$0xff] %vm353, %v481
          %484 = vst.msk [vmem:[%s327 + $0x8] sm:$0xff] %vm353, %v482
        $region64: #{tpu_custom_call.1} parent=39 // pred_fallthru
          _
        %s485 = sand.u32 %s174, 1
        %s486 = scalar_lea.sflag [#allocation5], %s485
        %s487 = sand.u32 %s174, 1
        %s488 = smul.addr %s487, 16
        %s489 = scalar_lea.vmem [#allocation9], %s488
        // Predicated region
        $region65: #{tpu_custom_call.1} parent=39 // pred_check
          %p490 = pneg %p184
        $region66: #{tpu_custom_call.1} parent=39 // pred_check_branch
          %492 = sbr.rel (%p490) target = $region68
        $region67: #{tpu_custom_call.1} parent=39 // pred_region
          %s493 = smul.u32 2, %s30
          %s495 = ssub.s32 256, 256
          %496 = vsyncadd %s486, %s495
          %s497 = smul.addr %s29, 2
          %s498 = sadd.s32 %s493, %s497
          %s499 = smul.addr %s498, 128
          %s500 = scalar_lea.hbm %s5, %s499
          %s501 = sshll.u32 %s489, 4
          %s502 = int_to_ptr.vmem [resolvable:$true] %s501
          %507 = dma.vmem_to_hbm [thread:$0]  %s502, 256, %s500, %s486, 128, 128, 8
        $region68: #{tpu_custom_call.1} parent=39 // pred_fallthru
          _
      $region40: #{tpu_custom_call.1} parent=5 // pred_fallthru
        _
      %p508 = scmp.le.s32.totalorder 2, %s19
      // Predicated region
      $region69: #{tpu_custom_call.1} parent=5 // pred_check
        %p509 = pneg %p508
      $region70: #{tpu_custom_call.1} parent=5 // pred_check_branch
        %511 = sbr.rel (%p509) target = $region72
      $region71: #{tpu_custom_call.1} parent=5 // pred_region
        %s512 = ssub.s32 %s19, 2
        // Predicated region
        $region73: #{tpu_custom_call.1} parent=71 // pred_check
          %p513 = pneg %p190
        $region74: #{tpu_custom_call.1} parent=71 // pred_check_branch
          %515 = sbr.rel (%p513) target = $region76
        $region75: #{tpu_custom_call.1} parent=71 // pred_region
          %s516 = sand.u32 %s175, 1
          %s517 = scalar_lea.sflag [#allocation5], %s516
          %s518 = sand.u32 %s175, 1
          %s519 = smul.addr %s518, 16
          %s520 = scalar_lea.vmem [#allocation9], %s519
          %521 = dma.done %s517, 256
        $region76: #{tpu_custom_call.1} parent=71 // pred_fallthru
          _
      $region72: #{tpu_custom_call.1} parent=5 // pred_fallthru
        _
    $region6: #{tpu_custom_call.1} parent=1 // loop_footer
      %s23 = sadd.s32 1, %s19
    $region7: #{tpu_custom_call.1} parent=1 // loop_footer_branch
      %18 = sbr.rel target = $region3
    $region8: #{tpu_custom_call.1} parent=1 // loop_exit
      _
    %522 = vsyncpa [#allocation4], 1
    %s523 = scalar_lea.sflag [#allocation4], 1
    %524 = vsyncpa %s523, 1
    %525 = vsyncpa [#allocation7], 1
    %526 = vsyncpa [#allocation5], 1
    %s527 = scalar_lea.sflag [#allocation5], 1
    %528 = vsyncpa %s527, 1

</llo_original>
